<compile_context>
chip_gen: v5e
topology: v5e:2x2
jax: 0.10.0
libtpu: 0.0.40
codegen_flags: <defaults>
</compile_context>

<pallas_src>
import functools

import jax
import jax.numpy as jnp
from jax.experimental import pallas as pl
from jax.experimental.pallas import tpu as pltpu

_MIB = 1024 * 1024


def _emb_dropout_kernel(factor_ref, *refs, n):
    """refs = (x_1..x_n, o_1..o_n); factor_ref is (tile_bt, n) f32 keep*scale."""
    x_refs = refs[:n]
    o_refs = refs[n:]
    for i in range(n):
        f_i = factor_ref[:, i:i + 1]                     # (tile_bt, 1) f32
        x = x_refs[i][...]                               # (tile_bt, D_i)
        # multiply in f32 (exact N/count scale), cast the product to out dtype
        o_refs[i][...] = (x.astype(jnp.float32) * f_i).astype(o_refs[i].dtype)


def _sublane_unit(dtype):
    # native sublane tile: f32 -> 8 rows, bf16 -> 16, int8/fp8 -> 32
    return 8 * max(1, 4 // jnp.dtype(dtype).itemsize)


def _tpu_vmem_params():
    """(physical VMEM bytes per core, multi-TensorCore chip?) — best effort."""
    try:
        dev = jax.devices()[0]
        if dev.platform != "tpu":
            return 128 * _MIB, False
        vmem = int(pltpu.get_tpu_info().vmem_capacity_bytes)
        kind = str(getattr(dev, "device_kind", "") or "").lower()
        multi_tc = ("v7" in kind) or vmem <= 64 * _MIB   # v7x: 2 TCs, 64 MiB VMEM/TC
        return vmem, multi_tc
    except Exception:
        return 128 * _MIB, False


def _pick_tile_bt(bt, row_bytes, sublane, budget, multi_tc):
    """Largest row-tile whose (double-buffered in+out) block set fits `budget`,
    is a multiple of `sublane`, and divides `bt`.  On multi-TC chips (v7x
    megacore) prefer an even number of grid steps; single-TC chips keep the
    biggest tile (extra steps only add fixed ~0.35 us overhead)."""
    max_rows = max(sublane, budget // max(row_bytes, 1))
    target = min(bt, max_rows)
    target = max(sublane, (target // sublane) * sublane)
    t = target
    while t > sublane and bt % t != 0:
        t -= sublane                                    # bt % sublane == 0, so t>=sublane divides
    if multi_tc and bt > sublane:
        steps = bt // t
        if steps % 2 == 1:
            t2, tries = t, 0
            while t2 > sublane and tries < 64:
                t2 -= sublane
                tries += 1
                if bt % t2 == 0 and (bt // t2) % 2 == 0:
                    t = t2
                    break
    return t


def embedding_dropout(xs, seed, p=0.5, training=True, tile_bt=None):
    """Pallas TPU implementation of EmbeddingDropout.forward.

    xs: sequence of arrays sharing the same leading dims (..., D_i); D_i and
        dtype may differ per array (mask broadcasts over the last dim).
    seed: int seed for the keep-mask RNG.
    """
    xs = list(xs)
    if p < 0 or p > 1:
        raise ValueError(f"dropout probability has to be between 0 and 1, but got {p}")
    if (not training) or p == 0.0:
        return xs
    n = len(xs)
    if n == 0:
        return xs
    if p >= 1.0:                          # every embedding dropped -> exact zeros
        return [jnp.zeros_like(x) for x in xs]

    lead = xs[0].shape[:-1]
    for x in xs:
        assert x.shape[:-1] == lead, "all embeddings must share leading dims"
    bt = 1
    for s in lead:
        bt *= s

    flats = [x.reshape(bt, x.shape[-1]) for x in xs]   # contiguous collapse: free view
    dims = [f.shape[-1] for f in flats]
    # NOTE: stores are fully lane-dense only when every D_i is a multiple of 128;
    # other widths still run but pay masked partial stores.

    sublane = max(_sublane_unit(f.dtype) for f in flats)
    bt_pad = ((bt + sublane - 1) // sublane) * sublane
    if bt_pad != bt:                       # pad a few rows so tiling/pipelining works for any BT
        flats = [jnp.pad(f, ((0, bt_pad - bt), (0, 0))) for f in flats]

    # Tiny (BT, N) keep*scale factor, computed in f32 with the XLA RNG outside
    # the kernel (pltpu.prng_* has no CPU/interpret lowering; this tensor is
    # ~N/sum(D) of the streamed bytes, i.e. noise).
    key = jax.random.PRNGKey(int(seed))
    u = jax.random.uniform(key, (bt_pad, n), dtype=jnp.float32)
    keep = u >= jnp.float32(p)
    count = jnp.sum(keep.astype(jnp.float32), axis=-1, keepdims=True)
    scale = jnp.float32(n) / jnp.maximum(count, 1.0)
    factor = jnp.where(keep, scale, jnp.float32(0.0))   # (bt_pad, n) f32

    # Generation-aware VMEM budgeting.
    vmem_cap, multi_tc = _tpu_vmem_params()
    block_budget = max(8 * _MIB, min(vmem_cap // 2 - 8 * _MIB, 48 * _MIB))
    vmem_limit = int(max(32 * _MIB, min(vmem_cap - 16 * _MIB, block_budget + 16 * _MIB)))

    # Bytes per row of the double-buffered in+out block set (+ f32 temp for
    # sub-f32 dtypes, + the factor stream).
    row_bytes = sum(
        (4 * jnp.dtype(f.dtype).itemsize + (4 if jnp.dtype(f.dtype).itemsize < 4 else 0)) * d
        for d, f in zip(dims, flats)) + 8 * n
    if tile_bt is None:
        tile_bt = _pick_tile_bt(bt_pad, row_bytes, sublane, block_budget, multi_tc)
    assert bt_pad % tile_bt == 0, "tile_bt must divide the (padded) position count"
    assert tile_bt % sublane == 0, f"tile_bt must be a multiple of {sublane}"

    kernel = functools.partial(_emb_dropout_kernel, n=n)
    idx = lambda i: (i, 0)

    outs = pl.pallas_call(
        kernel,
        grid=(bt_pad // tile_bt,),
        in_specs=[pl.BlockSpec((tile_bt, n), idx)]
                + [pl.BlockSpec((tile_bt, d), idx) for d in dims],
        out_specs=tuple(pl.BlockSpec((tile_bt, d), idx) for d in dims),
        out_shape=tuple(jax.ShapeDtypeStruct((bt_pad, d), f.dtype)
                        for d, f in zip(dims, flats)),
        compiler_params=pltpu.CompilerParams(
            dimension_semantics=("parallel",),
            vmem_limit_bytes=vmem_limit,
        ),
    )(factor, *flats)
    outs = list(outs) if isinstance(outs, (list, tuple)) else [outs]

    results = []
    for o, x in zip(outs, xs):
        if bt_pad != bt:
            o = o[:bt]
        results.append(o.reshape(x.shape))
    return results


if __name__ == "__main__":
    key = jax.random.PRNGKey(0)
    B, T = 2, 64
    specs = [(128, jnp.float32), (128, jnp.float32), (256, jnp.bfloat16)]
    n = len(specs)
    p = 0.5

    xs = []
    for i, (d, dt) in enumerate(specs):
        x = jax.random.normal(jax.random.fold_in(key, i), (B, T, d), dtype=jnp.float32)
        xs.append(x.astype(dt))

    outs = embedding_dropout(xs, seed=1234, p=p, training=True)
    outs = [jax.block_until_ready(o) for o in outs]

    # Verify module semantics directly from the outputs (RNG-agnostic): a
    # position is "kept" for embedding i iff its output row is nonzero, and
    # every kept row must equal x * (n / max(#kept embeddings, 1)).
    bt = B * T
    keep = jnp.stack(
        [jnp.any(jnp.abs(o.reshape(bt, -1).astype(jnp.float32)) > 0, axis=-1) for o in outs])
    count = jnp.sum(keep.astype(jnp.float32), axis=0)
    scale = n / jnp.maximum(count, 1.0)
    for x, o, k in zip(xs, outs, keep):
        assert o.shape == x.shape and o.dtype == x.dtype
        fac = (k.astype(jnp.float32) * scale).reshape(B, T, 1)
        ref = x.astype(jnp.float32) * fac
        tol = 2e-2 if x.dtype == jnp.bfloat16 else 1e-5
        assert jnp.allclose(o.astype(jnp.float32), ref, atol=tol, rtol=tol), "value mismatch"
    drop_rate = 1.0 - float(jnp.mean(keep.astype(jnp.float32)))
    assert 0.3 < drop_rate < 0.7, f"implausible drop rate {drop_rate}"

    # eval-mode / p == 0 pass-through, p == 1 all-drop
    for o, x in zip(embedding_dropout(xs, seed=1, p=p, training=False), xs):
        assert o is x
    for o, x in zip(embedding_dropout(xs, seed=1, p=0.0, training=True), xs):
        assert o is x
    for o, x in zip(embedding_dropout(xs, seed=1, p=1.0, training=True), xs):
        assert float(jnp.max(jnp.abs(o.astype(jnp.float32)))) == 0.0

    print("KERNEL_OK")
</pallas_src>

<mosaic_0001>
module attributes {stable_mosaic.version = 11 : i64} {
  func.func @_emb_dropout_kernel(%arg0: i32, %arg1: memref<128x3xf32, #tpu.memory_space<vmem>>, %arg2: memref<128x128xf32, #tpu.memory_space<vmem>>, %arg3: memref<128x128xf32, #tpu.memory_space<vmem>>, %arg4: memref<128x256xbf16, #tpu.memory_space<vmem>>, %arg5: memref<128x128xf32, #tpu.memory_space<vmem>>, %arg6: memref<128x128xf32, #tpu.memory_space<vmem>>, %arg7: memref<128x256xbf16, #tpu.memory_space<vmem>>) attributes {dimension_semantics = [#tpu.dimension_semantics<parallel>], iteration_bounds = array<i64: 1>, scalar_prefetch = 0 : i64, scratch_operands = 0 : i64, tpu.core_type = #tpu.core_type<tc>, window_params = [{transform_indices = @transform_0, window_bounds = array<i64: 128, 3>}, {transform_indices = @transform_1, window_bounds = array<i64: 128, 128>}, {transform_indices = @transform_2, window_bounds = array<i64: 128, 128>}, {transform_indices = @transform_3, window_bounds = array<i64: 128, 256>}, {transform_indices = @transform_4, window_bounds = array<i64: 128, 128>}, {transform_indices = @transform_5, window_bounds = array<i64: 128, 128>}, {transform_indices = @transform_6, window_bounds = array<i64: 128, 256>}]} {
    %c0 = arith.constant 0 : index
    %c0_0 = arith.constant 0 : index
    %0 = vector.load %arg1[%c0, %c0_0] : memref<128x3xf32, #tpu.memory_space<vmem>>, vector<128x1xf32>
    %c0_1 = arith.constant 0 : index
    %c0_2 = arith.constant 0 : index
    %1 = vector.load %arg2[%c0_1, %c0_2] : memref<128x128xf32, #tpu.memory_space<vmem>>, vector<128x128xf32>
    %2 = vector.broadcast %0 : vector<128x1xf32> to vector<128x128xf32>
    %3 = arith.mulf %1, %2 : vector<128x128xf32>
    %c0_3 = arith.constant 0 : index
    %c0_4 = arith.constant 0 : index
    %4 = vector.load %arg5[%c0_3, %c0_4] : memref<128x128xf32, #tpu.memory_space<vmem>>, vector<128x128xf32>
    tpu.vector_store %arg5[%c0_3, %c0_4], %3 {strides = array<i32>} : memref<128x128xf32, #tpu.memory_space<vmem>>, vector<128x128xf32>,
    %c0_5 = arith.constant 0 : index
    %c1 = arith.constant 1 : index
    %5 = vector.load %arg1[%c0_5, %c1] : memref<128x3xf32, #tpu.memory_space<vmem>>, vector<128x1xf32>
    %c0_6 = arith.constant 0 : index
    %c0_7 = arith.constant 0 : index
    %6 = vector.load %arg3[%c0_6, %c0_7] : memref<128x128xf32, #tpu.memory_space<vmem>>, vector<128x128xf32>
    %7 = vector.broadcast %5 : vector<128x1xf32> to vector<128x128xf32>
    %8 = arith.mulf %6, %7 : vector<128x128xf32>
    %c0_8 = arith.constant 0 : index
    %c0_9 = arith.constant 0 : index
    %9 = vector.load %arg6[%c0_8, %c0_9] : memref<128x128xf32, #tpu.memory_space<vmem>>, vector<128x128xf32>
    tpu.vector_store %arg6[%c0_8, %c0_9], %8 {strides = array<i32>} : memref<128x128xf32, #tpu.memory_space<vmem>>, vector<128x128xf32>,
    %c0_10 = arith.constant 0 : index
    %c2 = arith.constant 2 : index
    %10 = vector.load %arg1[%c0_10, %c2] : memref<128x3xf32, #tpu.memory_space<vmem>>, vector<128x1xf32>
    %c0_11 = arith.constant 0 : index
    %c0_12 = arith.constant 0 : index
    %11 = vector.load %arg4[%c0_11, %c0_12] : memref<128x256xbf16, #tpu.memory_space<vmem>>, vector<128x256xbf16>
    %12 = arith.extf %11 : vector<128x256xbf16> to vector<128x256xf32>
    %13 = vector.broadcast %10 : vector<128x1xf32> to vector<128x256xf32>
    %14 = arith.mulf %12, %13 : vector<128x256xf32>
    %15 = arith.truncf %14 : vector<128x256xf32> to vector<128x256xbf16>
    %c0_13 = arith.constant 0 : index
    %c0_14 = arith.constant 0 : index
    %16 = vector.load %arg7[%c0_13, %c0_14] : memref<128x256xbf16, #tpu.memory_space<vmem>>, vector<128x256xbf16>
    tpu.vector_store %arg7[%c0_13, %c0_14], %15 {strides = array<i32>} : memref<128x256xbf16, #tpu.memory_space<vmem>>, vector<128x256xbf16>,
    return
  }
  func.func @transform_0(%arg0: i32) -> (i32, i32) {
    %c0_i32 = arith.constant 0 : i32
    %c0_i32_0 = arith.constant 0 : i32
    return %arg0, %c0_i32 : i32, i32
  }
  func.func @transform_1(%arg0: i32) -> (i32, i32) {
    %c0_i32 = arith.constant 0 : i32
    %c0_i32_0 = arith.constant 0 : i32
    return %arg0, %c0_i32 : i32, i32
  }
  func.func @transform_2(%arg0: i32) -> (i32, i32) {
    %c0_i32 = arith.constant 0 : i32
    %c0_i32_0 = arith.constant 0 : i32
    return %arg0, %c0_i32 : i32, i32
  }
  func.func @transform_3(%arg0: i32) -> (i32, i32) {
    %c0_i32 = arith.constant 0 : i32
    %c0_i32_0 = arith.constant 0 : i32
    return %arg0, %c0_i32 : i32, i32
  }
  func.func @transform_4(%arg0: i32) -> (i32, i32) {
    %c0_i32 = arith.constant 0 : i32
    %c0_i32_0 = arith.constant 0 : i32
    return %arg0, %c0_i32 : i32, i32
  }
  func.func @transform_5(%arg0: i32) -> (i32, i32) {
    %c0_i32 = arith.constant 0 : i32
    %c0_i32_0 = arith.constant 0 : i32
    return %arg0, %c0_i32 : i32, i32
  }
  func.func @transform_6(%arg0: i32) -> (i32, i32) {
    %c0_i32 = arith.constant 0 : i32
    %c0_i32_0 = arith.constant 0 : i32
    return %arg0, %c0_i32 : i32, i32
  }
}

</mosaic_0001>

<llo_original>
// kernel: tpu_custom_call.1
$region0: #{tpu_custom_call.1}
  #allocation0 [shape = 'u32[]', space=smem, size = 0x4, offset = 0x4, fixed_abs, tag = 'smem constant byte address 0x4 - core index']
  #allocation1 [shape = 'u32[72,128]{1,0:T(1,128)}', space=vmem, size = 0x9000, scoped, tag = 'internal scratch']
  %s0 = inlined_call_operand.vmem [shape: f32[128,3], index: 0, kind: input, shape index: {}]
  %s1 = inlined_call_operand.vmem [shape: f32[128,128], index: 1, kind: input, shape index: {}]
  %s2 = inlined_call_operand.hbm [shape: f32[128,128], index: 2, kind: input, shape index: {}]
  %s3 = inlined_call_operand.hbm [shape: bf16[128,256], index: 3, kind: input, shape index: {}]
  %s4 = inlined_call_operand.hbm [shape: f32[128,128], index: 4, kind: output, shape index: {0}]
  %s5 = inlined_call_operand.hbm [shape: f32[128,128], index: 5, kind: output, shape index: {1}]
  %s6 = inlined_call_operand.hbm [shape: bf16[128,256], index: 6, kind: output, shape index: {2}]
  %7 = xla_tuple %s4, %s5, %s6
  %s8 = sld [smem:[#allocation0]]
  $region50: #{tpu_custom_call.1} parent=0
    _
  %s10 = ssub.s32 1, %s8
  %s11 = scalar_select 0, %s10, %s8
  $region1: #{tpu_custom_call.1} parent=0
    #allocation2 [shape = 'u8[65536]{0}', space=vmem, size = 0x10000, scoped, tag = 'input window, operand 2, single buffered']
    #allocation3 [shape = 's32[1]{0}', space=sflag, size = 0x4, scoped, tag = 'scoped memory for tpu_custom_call.1']
    #allocation4 [shape = 's32[1]{0}', space=sflag, size = 0x4, scoped, tag = 'scoped memory for tpu_custom_call.1']
    #allocation5 [shape = 'u8[65536]{0}', space=vmem, size = 0x10000, scoped, tag = 'input window, operand 3, single buffered']
    #allocation6 [shape = 's32[1]{0}', space=sflag, size = 0x4, scoped, tag = 'scoped memory for tpu_custom_call.1']
    #allocation7 [shape = 'u8[65536]{0}', space=vmem, size = 0x10000, scoped, tag = 'output window, operand 0, single buffered']
    #allocation8 [shape = 'u8[65536]{0}', space=vmem, size = 0x10000, scoped, tag = 'output window, operand 1, single buffered']
    #allocation9 [shape = 's32[1]{0}', space=sflag, size = 0x4, scoped, tag = 'scoped memory for tpu_custom_call.1']
    #allocation10 [shape = 'u8[65536]{0}', space=vmem, size = 0x10000, scoped, tag = 'output window, operand 2, single buffered']
    %12 = vsyncpa [#allocation3], 0
    %13 = vsyncpa [#allocation6], 0
    %14 = vsyncpa [#allocation4], 0
    %15 = vsyncpa [#allocation9], 0
    // Predicated region
    $region2: #{tpu_custom_call.1} parent=1 // pred_check
      _
    $region3: #{tpu_custom_call.1} parent=1 // pred_check_branch
      %17 = sbr.rel (0) target = $region5
    $region4: #{tpu_custom_call.1} parent=1 // pred_region
      _
    $region5: #{tpu_custom_call.1} parent=1 // pred_fallthru
      _
    // Predicated region
    $region6: #{tpu_custom_call.1} parent=1 // pred_check
      _
    $region7: #{tpu_custom_call.1} parent=1 // pred_check_branch
      %19 = sbr.rel (0) target = $region9
    $region8: #{tpu_custom_call.1} parent=1 // pred_region
      _
    $region9: #{tpu_custom_call.1} parent=1 // pred_fallthru
      _
    // Predicated region
    $region10: #{tpu_custom_call.1} parent=1 // pred_check
      _
    $region11: #{tpu_custom_call.1} parent=1 // pred_check_branch
      %21 = sbr.rel (0) target = $region13
    $region12: #{tpu_custom_call.1} parent=1 // pred_region
      %23 = vsyncadd [#allocation3], 0
      %s24 = sshll.u32 %s2, 4
      %s25 = int_to_ptr.hbm [resolvable:$true] %s24
      %s26 = sshll.u32 [#allocation2], 4
      %s27 = int_to_ptr.vmem [resolvable:$true] %s26
      %32 = dma.hbm_to_vmem [thread:$0]  %s25, 2048, %s27, [#allocation3], 128, 128, 8
    $region13: #{tpu_custom_call.1} parent=1 // pred_fallthru
      _
    // Predicated region
    $region14: #{tpu_custom_call.1} parent=1 // pred_check
      _
    $region15: #{tpu_custom_call.1} parent=1 // pred_check_branch
      %34 = sbr.rel (0) target = $region17
    $region16: #{tpu_custom_call.1} parent=1 // pred_region
      %36 = vsyncadd [#allocation6], 0
      %s37 = sshll.u32 %s3, 4
      %s38 = int_to_ptr.hbm [resolvable:$true] %s37
      %s39 = sshll.u32 [#allocation5], 4
      %s40 = int_to_ptr.vmem [resolvable:$true] %s39
      %45 = dma.hbm_to_vmem [thread:$0]  %s38, 2048, %s40, [#allocation6], 128, 128, 8
    $region17: #{tpu_custom_call.1} parent=1 // pred_fallthru
      _
    // Predicated region
    $region18: #{tpu_custom_call.1} parent=1 // pred_check
      _
    $region19: #{tpu_custom_call.1} parent=1 // pred_check_branch
      %47 = sbr.rel (0) target = $region21
    $region20: #{tpu_custom_call.1} parent=1 // pred_region
      %49 = dma.done [#allocation3], 2048
    $region21: #{tpu_custom_call.1} parent=1 // pred_fallthru
      _
    // Predicated region
    $region22: #{tpu_custom_call.1} parent=1 // pred_check
      _
    $region23: #{tpu_custom_call.1} parent=1 // pred_check_branch
      %51 = sbr.rel (0) target = $region25
    $region24: #{tpu_custom_call.1} parent=1 // pred_region
      %53 = dma.done [#allocation6], 2048
    $region25: #{tpu_custom_call.1} parent=1 // pred_fallthru
      _
    %v54 = vld [vmem:[%s0] sm:$0xff]
    %v55 = vld [vmem:[%s0 + $0x8] sm:$0xff]
    %v56 = vld [vmem:[%s0 + $0x10] sm:$0xff]
    %v57 = vld [vmem:[%s0 + $0x18] sm:$0xff]
    %v58 = vld [vmem:[%s0 + $0x20] sm:$0xff]
    %v59 = vld [vmem:[%s0 + $0x28] sm:$0xff]
    %v60 = vld [vmem:[%s0 + $0x30] sm:$0xff]
    %v61 = vld [vmem:[%s0 + $0x38] sm:$0xff]
    %v62 = vld [vmem:[%s0 + $0x40] sm:$0xff]
    %v63 = vld [vmem:[%s0 + $0x48] sm:$0xff]
    %v64 = vld [vmem:[%s0 + $0x50] sm:$0xff]
    %v65 = vld [vmem:[%s0 + $0x58] sm:$0xff]
    %v66 = vld [vmem:[%s0 + $0x60] sm:$0xff]
    %v67 = vld [vmem:[%s0 + $0x68] sm:$0xff]
    %v68 = vld [vmem:[%s0 + $0x70] sm:$0xff]
    %v69 = vld [vmem:[%s0 + $0x78] sm:$0xff]
    %v70 = vld [vmem:[%s1] sm:$0xff]
    %v71 = vld [vmem:[%s1 + $0x8] sm:$0xff]
    %v72 = vld [vmem:[%s1 + $0x10] sm:$0xff]
    %v73 = vld [vmem:[%s1 + $0x18] sm:$0xff]
    %v74 = vld [vmem:[%s1 + $0x20] sm:$0xff]
    %v75 = vld [vmem:[%s1 + $0x28] sm:$0xff]
    %v76 = vld [vmem:[%s1 + $0x30] sm:$0xff]
    %v77 = vld [vmem:[%s1 + $0x38] sm:$0xff]
    %v78 = vld [vmem:[%s1 + $0x40] sm:$0xff]
    %v79 = vld [vmem:[%s1 + $0x48] sm:$0xff]
    %v80 = vld [vmem:[%s1 + $0x50] sm:$0xff]
    %v81 = vld [vmem:[%s1 + $0x58] sm:$0xff]
    %v82 = vld [vmem:[%s1 + $0x60] sm:$0xff]
    %v83 = vld [vmem:[%s1 + $0x68] sm:$0xff]
    %v84 = vld [vmem:[%s1 + $0x70] sm:$0xff]
    %v85 = vld [vmem:[%s1 + $0x78] sm:$0xff]
    %87 = vset.pattern.permute.xlu0 0
    %88 = vperm.xlu0 %87, %v54
    %v89 = vpop.permute.xlu0 %88
    %92 = vset.pattern.permute.xlu0 0
    %93 = vperm.xlu0 %92, %v55
    %v94 = vpop.permute.xlu0 %93
    %97 = vset.pattern.permute.xlu0 0
    %98 = vperm.xlu0 %97, %v56
    %v99 = vpop.permute.xlu0 %98
    %102 = vset.pattern.permute.xlu0 0
    %103 = vperm.xlu0 %102, %v57
    %v104 = vpop.permute.xlu0 %103
    %107 = vset.pattern.permute.xlu0 0
    %108 = vperm.xlu0 %107, %v58
    %v109 = vpop.permute.xlu0 %108
    %112 = vset.pattern.permute.xlu0 0
    %113 = vperm.xlu0 %112, %v59
    %v114 = vpop.permute.xlu0 %113
    %117 = vset.pattern.permute.xlu0 0
    %118 = vperm.xlu0 %117, %v60
    %v119 = vpop.permute.xlu0 %118
    %122 = vset.pattern.permute.xlu0 0
    %123 = vperm.xlu0 %122, %v61
    %v124 = vpop.permute.xlu0 %123
    %127 = vset.pattern.permute.xlu0 0
    %128 = vperm.xlu0 %127, %v62
    %v129 = vpop.permute.xlu0 %128
    %132 = vset.pattern.permute.xlu0 0
    %133 = vperm.xlu0 %132, %v63
    %v134 = vpop.permute.xlu0 %133
    %137 = vset.pattern.permute.xlu0 0
    %138 = vperm.xlu0 %137, %v64
    %v139 = vpop.permute.xlu0 %138
    %142 = vset.pattern.permute.xlu0 0
    %143 = vperm.xlu0 %142, %v65
    %v144 = vpop.permute.xlu0 %143
    %147 = vset.pattern.permute.xlu0 0
    %148 = vperm.xlu0 %147, %v66
    %v149 = vpop.permute.xlu0 %148
    %152 = vset.pattern.permute.xlu0 0
    %153 = vperm.xlu0 %152, %v67
    %v154 = vpop.permute.xlu0 %153
    %157 = vset.pattern.permute.xlu0 0
    %158 = vperm.xlu0 %157, %v68
    %v159 = vpop.permute.xlu0 %158
    %162 = vset.pattern.permute.xlu0 0
    %163 = vperm.xlu0 %162, %v69
    %v164 = vpop.permute.xlu0 %163
    %v166 = vmul.f32 %v70, %v89
    %v167 = vmul.f32 %v71, %v94
    %v168 = vmul.f32 %v72, %v99
    %v169 = vmul.f32 %v73, %v104
    %v170 = vmul.f32 %v74, %v109
    %v171 = vmul.f32 %v75, %v114
    %v172 = vmul.f32 %v76, %v119
    %v173 = vmul.f32 %v77, %v124
    %v174 = vmul.f32 %v78, %v129
    %v175 = vmul.f32 %v79, %v134
    %v176 = vmul.f32 %v80, %v139
    %v177 = vmul.f32 %v81, %v144
    %v178 = vmul.f32 %v82, %v149
    %v179 = vmul.f32 %v83, %v154
    %v180 = vmul.f32 %v84, %v159
    %v181 = vmul.f32 %v85, %v164
    %182 = vst [vmem:[#allocation7] sm:$0xff] %v166
    %183 = vst [vmem:[#allocation7 + $0x8] sm:$0xff] %v167
    %184 = vst [vmem:[#allocation7 + $0x10] sm:$0xff] %v168
    %185 = vst [vmem:[#allocation7 + $0x18] sm:$0xff] %v169
    %186 = vst [vmem:[#allocation7 + $0x20] sm:$0xff] %v170
    %187 = vst [vmem:[#allocation7 + $0x28] sm:$0xff] %v171
    %188 = vst [vmem:[#allocation7 + $0x30] sm:$0xff] %v172
    %189 = vst [vmem:[#allocation7 + $0x38] sm:$0xff] %v173
    %190 = vst [vmem:[#allocation7 + $0x40] sm:$0xff] %v174
    %191 = vst [vmem:[#allocation7 + $0x48] sm:$0xff] %v175
    %192 = vst [vmem:[#allocation7 + $0x50] sm:$0xff] %v176
    %193 = vst [vmem:[#allocation7 + $0x58] sm:$0xff] %v177
    %194 = vst [vmem:[#allocation7 + $0x60] sm:$0xff] %v178
    %195 = vst [vmem:[#allocation7 + $0x68] sm:$0xff] %v179
    %196 = vst [vmem:[#allocation7 + $0x70] sm:$0xff] %v180
    %197 = vst [vmem:[#allocation7 + $0x78] sm:$0xff] %v181
    %v198 = vld [vmem:[%s0] sm:$0xff]
    %v199 = vld [vmem:[%s0 + $0x8] sm:$0xff]
    %v200 = vld [vmem:[%s0 + $0x10] sm:$0xff]
    %v201 = vld [vmem:[%s0 + $0x18] sm:$0xff]
    %v202 = vld [vmem:[%s0 + $0x20] sm:$0xff]
    %v203 = vld [vmem:[%s0 + $0x28] sm:$0xff]
    %v204 = vld [vmem:[%s0 + $0x30] sm:$0xff]
    %v205 = vld [vmem:[%s0 + $0x38] sm:$0xff]
    %v206 = vld [vmem:[%s0 + $0x40] sm:$0xff]
    %v207 = vld [vmem:[%s0 + $0x48] sm:$0xff]
    %v208 = vld [vmem:[%s0 + $0x50] sm:$0xff]
    %v209 = vld [vmem:[%s0 + $0x58] sm:$0xff]
    %v210 = vld [vmem:[%s0 + $0x60] sm:$0xff]
    %v211 = vld [vmem:[%s0 + $0x68] sm:$0xff]
    %v212 = vld [vmem:[%s0 + $0x70] sm:$0xff]
    %v213 = vld [vmem:[%s0 + $0x78] sm:$0xff]
    %v214 = vld [vmem:[#allocation2] sm:$0xff]
    %v215 = vld [vmem:[#allocation2 + $0x8] sm:$0xff]
    %v216 = vld [vmem:[#allocation2 + $0x10] sm:$0xff]
    %v217 = vld [vmem:[#allocation2 + $0x18] sm:$0xff]
    %v218 = vld [vmem:[#allocation2 + $0x20] sm:$0xff]
    %v219 = vld [vmem:[#allocation2 + $0x28] sm:$0xff]
    %v220 = vld [vmem:[#allocation2 + $0x30] sm:$0xff]
    %v221 = vld [vmem:[#allocation2 + $0x38] sm:$0xff]
    %v222 = vld [vmem:[#allocation2 + $0x40] sm:$0xff]
    %v223 = vld [vmem:[#allocation2 + $0x48] sm:$0xff]
    %v224 = vld [vmem:[#allocation2 + $0x50] sm:$0xff]
    %v225 = vld [vmem:[#allocation2 + $0x58] sm:$0xff]
    %v226 = vld [vmem:[#allocation2 + $0x60] sm:$0xff]
    %v227 = vld [vmem:[#allocation2 + $0x68] sm:$0xff]
    %v228 = vld [vmem:[#allocation2 + $0x70] sm:$0xff]
    %v229 = vld [vmem:[#allocation2 + $0x78] sm:$0xff]
    %231 = vset.pattern.permute.xlu0 1
    %232 = vperm.xlu0 %231, %v198
    %v233 = vpop.permute.xlu0 %232
    %236 = vset.pattern.permute.xlu0 1
    %237 = vperm.xlu0 %236, %v199
    %v238 = vpop.permute.xlu0 %237
    %241 = vset.pattern.permute.xlu0 1
    %242 = vperm.xlu0 %241, %v200
    %v243 = vpop.permute.xlu0 %242
    %246 = vset.pattern.permute.xlu0 1
    %247 = vperm.xlu0 %246, %v201
    %v248 = vpop.permute.xlu0 %247
    %251 = vset.pattern.permute.xlu0 1
    %252 = vperm.xlu0 %251, %v202
    %v253 = vpop.permute.xlu0 %252
    %256 = vset.pattern.permute.xlu0 1
    %257 = vperm.xlu0 %256, %v203
    %v258 = vpop.permute.xlu0 %257
    %261 = vset.pattern.permute.xlu0 1
    %262 = vperm.xlu0 %261, %v204
    %v263 = vpop.permute.xlu0 %262
    %266 = vset.pattern.permute.xlu0 1
    %267 = vperm.xlu0 %266, %v205
    %v268 = vpop.permute.xlu0 %267
    %271 = vset.pattern.permute.xlu0 1
    %272 = vperm.xlu0 %271, %v206
    %v273 = vpop.permute.xlu0 %272
    %276 = vset.pattern.permute.xlu0 1
    %277 = vperm.xlu0 %276, %v207
    %v278 = vpop.permute.xlu0 %277
    %281 = vset.pattern.permute.xlu0 1
    %282 = vperm.xlu0 %281, %v208
    %v283 = vpop.permute.xlu0 %282
    %286 = vset.pattern.permute.xlu0 1
    %287 = vperm.xlu0 %286, %v209
    %v288 = vpop.permute.xlu0 %287
    %291 = vset.pattern.permute.xlu0 1
    %292 = vperm.xlu0 %291, %v210
    %v293 = vpop.permute.xlu0 %292
    %296 = vset.pattern.permute.xlu0 1
    %297 = vperm.xlu0 %296, %v211
    %v298 = vpop.permute.xlu0 %297
    %301 = vset.pattern.permute.xlu0 1
    %302 = vperm.xlu0 %301, %v212
    %v303 = vpop.permute.xlu0 %302
    %306 = vset.pattern.permute.xlu0 1
    %307 = vperm.xlu0 %306, %v213
    %v308 = vpop.permute.xlu0 %307
    %v310 = vmul.f32 %v214, %v233
    %v311 = vmul.f32 %v215, %v238
    %v312 = vmul.f32 %v216, %v243
    %v313 = vmul.f32 %v217, %v248
    %v314 = vmul.f32 %v218, %v253
    %v315 = vmul.f32 %v219, %v258
    %v316 = vmul.f32 %v220, %v263
    %v317 = vmul.f32 %v221, %v268
    %v318 = vmul.f32 %v222, %v273
    %v319 = vmul.f32 %v223, %v278
    %v320 = vmul.f32 %v224, %v283
    %v321 = vmul.f32 %v225, %v288
    %v322 = vmul.f32 %v226, %v293
    %v323 = vmul.f32 %v227, %v298
    %v324 = vmul.f32 %v228, %v303
    %v325 = vmul.f32 %v229, %v308
    %326 = vst [vmem:[#allocation8] sm:$0xff] %v310
    %327 = vst [vmem:[#allocation8 + $0x8] sm:$0xff] %v311
    %328 = vst [vmem:[#allocation8 + $0x10] sm:$0xff] %v312
    %329 = vst [vmem:[#allocation8 + $0x18] sm:$0xff] %v313
    %330 = vst [vmem:[#allocation8 + $0x20] sm:$0xff] %v314
    %331 = vst [vmem:[#allocation8 + $0x28] sm:$0xff] %v315
    %332 = vst [vmem:[#allocation8 + $0x30] sm:$0xff] %v316
    %333 = vst [vmem:[#allocation8 + $0x38] sm:$0xff] %v317
    %334 = vst [vmem:[#allocation8 + $0x40] sm:$0xff] %v318
    %335 = vst [vmem:[#allocation8 + $0x48] sm:$0xff] %v319
    %336 = vst [vmem:[#allocation8 + $0x50] sm:$0xff] %v320
    %337 = vst [vmem:[#allocation8 + $0x58] sm:$0xff] %v321
    %338 = vst [vmem:[#allocation8 + $0x60] sm:$0xff] %v322
    %339 = vst [vmem:[#allocation8 + $0x68] sm:$0xff] %v323
    %340 = vst [vmem:[#allocation8 + $0x70] sm:$0xff] %v324
    %341 = vst [vmem:[#allocation8 + $0x78] sm:$0xff] %v325
    %v342 = vld [vmem:[%s0] sm:$0xff]
    %v343 = vld [vmem:[%s0 + $0x8] sm:$0xff]
    %v344 = vld [vmem:[%s0 + $0x10] sm:$0xff]
    %v345 = vld [vmem:[%s0 + $0x18] sm:$0xff]
    %v346 = vld [vmem:[%s0 + $0x20] sm:$0xff]
    %v347 = vld [vmem:[%s0 + $0x28] sm:$0xff]
    %v348 = vld [vmem:[%s0 + $0x30] sm:$0xff]
    %v349 = vld [vmem:[%s0 + $0x38] sm:$0xff]
    %v350 = vld [vmem:[%s0 + $0x40] sm:$0xff]
    %v351 = vld [vmem:[%s0 + $0x48] sm:$0xff]
    %v352 = vld [vmem:[%s0 + $0x50] sm:$0xff]
    %v353 = vld [vmem:[%s0 + $0x58] sm:$0xff]
    %v354 = vld [vmem:[%s0 + $0x60] sm:$0xff]
    %v355 = vld [vmem:[%s0 + $0x68] sm:$0xff]
    %v356 = vld [vmem:[%s0 + $0x70] sm:$0xff]
    %v357 = vld [vmem:[%s0 + $0x78] sm:$0xff]
    %v358 = vld [vmem:[#allocation5] sm:$0xff]
    %v359 = vld [vmem:[#allocation5 + $0x8] sm:$0xff]
    %v360 = vld [vmem:[#allocation5 + $0x10] sm:$0xff]
    %v361 = vld [vmem:[#allocation5 + $0x18] sm:$0xff]
    %v362 = vld [vmem:[#allocation5 + $0x20] sm:$0xff]
    %v363 = vld [vmem:[#allocation5 + $0x28] sm:$0xff]
    %v364 = vld [vmem:[#allocation5 + $0x30] sm:$0xff]
    %v365 = vld [vmem:[#allocation5 + $0x38] sm:$0xff]
    %v366 = vld [vmem:[#allocation5 + $0x40] sm:$0xff]
    %v367 = vld [vmem:[#allocation5 + $0x48] sm:$0xff]
    %v368 = vld [vmem:[#allocation5 + $0x50] sm:$0xff]
    %v369 = vld [vmem:[#allocation5 + $0x58] sm:$0xff]
    %v370 = vld [vmem:[#allocation5 + $0x60] sm:$0xff]
    %v371 = vld [vmem:[#allocation5 + $0x68] sm:$0xff]
    %v372 = vld [vmem:[#allocation5 + $0x70] sm:$0xff]
    %v373 = vld [vmem:[#allocation5 + $0x78] sm:$0xff]
    %v374 = vunpack.c.l.bf16 %v358
    %v375 = vunpack.c.h.bf16 %v358
    %v376 = vunpack.c.l.bf16 %v359
    %v377 = vunpack.c.h.bf16 %v359
    %v378 = vunpack.c.l.bf16 %v360
    %v379 = vunpack.c.h.bf16 %v360
    %v380 = vunpack.c.l.bf16 %v361
    %v381 = vunpack.c.h.bf16 %v361
    %v382 = vunpack.c.l.bf16 %v362
    %v383 = vunpack.c.h.bf16 %v362
    %v384 = vunpack.c.l.bf16 %v363
    %v385 = vunpack.c.h.bf16 %v363
    %v386 = vunpack.c.l.bf16 %v364
    %v387 = vunpack.c.h.bf16 %v364
    %v388 = vunpack.c.l.bf16 %v365
    %v389 = vunpack.c.h.bf16 %v365
    %v390 = vunpack.c.l.bf16 %v366
    %v391 = vunpack.c.h.bf16 %v366
    %v392 = vunpack.c.l.bf16 %v367
    %v393 = vunpack.c.h.bf16 %v367
    %v394 = vunpack.c.l.bf16 %v368
    %v395 = vunpack.c.h.bf16 %v368
    %v396 = vunpack.c.l.bf16 %v369
    %v397 = vunpack.c.h.bf16 %v369
    %v398 = vunpack.c.l.bf16 %v370
    %v399 = vunpack.c.h.bf16 %v370
    %v400 = vunpack.c.l.bf16 %v371
    %v401 = vunpack.c.h.bf16 %v371
    %v402 = vunpack.c.l.bf16 %v372
    %v403 = vunpack.c.h.bf16 %v372
    %v404 = vunpack.c.l.bf16 %v373
    %v405 = vunpack.c.h.bf16 %v373
    %407 = vset.pattern.permute.xlu0 2
    %408 = vperm.xlu0 %407, %v342
    %v409 = vpop.permute.xlu0 %408
    %412 = vset.pattern.permute.xlu0 2
    %413 = vperm.xlu0 %412, %v343
    %v414 = vpop.permute.xlu0 %413
    %417 = vset.pattern.permute.xlu0 2
    %418 = vperm.xlu0 %417, %v344
    %v419 = vpop.permute.xlu0 %418
    %422 = vset.pattern.permute.xlu0 2
    %423 = vperm.xlu0 %422, %v345
    %v424 = vpop.permute.xlu0 %423
    %427 = vset.pattern.permute.xlu0 2
    %428 = vperm.xlu0 %427, %v346
    %v429 = vpop.permute.xlu0 %428
    %432 = vset.pattern.permute.xlu0 2
    %433 = vperm.xlu0 %432, %v347
    %v434 = vpop.permute.xlu0 %433
    %437 = vset.pattern.permute.xlu0 2
    %438 = vperm.xlu0 %437, %v348
    %v439 = vpop.permute.xlu0 %438
    %442 = vset.pattern.permute.xlu0 2
    %443 = vperm.xlu0 %442, %v349
    %v444 = vpop.permute.xlu0 %443
    %447 = vset.pattern.permute.xlu0 2
    %448 = vperm.xlu0 %447, %v350
    %v449 = vpop.permute.xlu0 %448
    %452 = vset.pattern.permute.xlu0 2
    %453 = vperm.xlu0 %452, %v351
    %v454 = vpop.permute.xlu0 %453
    %457 = vset.pattern.permute.xlu0 2
    %458 = vperm.xlu0 %457, %v352
    %v459 = vpop.permute.xlu0 %458
    %462 = vset.pattern.permute.xlu0 2
    %463 = vperm.xlu0 %462, %v353
    %v464 = vpop.permute.xlu0 %463
    %467 = vset.pattern.permute.xlu0 2
    %468 = vperm.xlu0 %467, %v354
    %v469 = vpop.permute.xlu0 %468
    %472 = vset.pattern.permute.xlu0 2
    %473 = vperm.xlu0 %472, %v355
    %v474 = vpop.permute.xlu0 %473
    %477 = vset.pattern.permute.xlu0 2
    %478 = vperm.xlu0 %477, %v356
    %v479 = vpop.permute.xlu0 %478
    %482 = vset.pattern.permute.xlu0 2
    %483 = vperm.xlu0 %482, %v357
    %v484 = vpop.permute.xlu0 %483
    %v486 = vmul.f32 %v374, %v409
    %v487 = vmul.f32 %v375, %v409
    %v488 = vmul.f32 %v376, %v414
    %v489 = vmul.f32 %v377, %v414
    %v490 = vmul.f32 %v378, %v419
    %v491 = vmul.f32 %v379, %v419
    %v492 = vmul.f32 %v380, %v424
    %v493 = vmul.f32 %v381, %v424
    %v494 = vmul.f32 %v382, %v429
    %v495 = vmul.f32 %v383, %v429
    %v496 = vmul.f32 %v384, %v434
    %v497 = vmul.f32 %v385, %v434
    %v498 = vmul.f32 %v386, %v439
    %v499 = vmul.f32 %v387, %v439
    %v500 = vmul.f32 %v388, %v444
    %v501 = vmul.f32 %v389, %v444
    %v502 = vmul.f32 %v390, %v449
    %v503 = vmul.f32 %v391, %v449
    %v504 = vmul.f32 %v392, %v454
    %v505 = vmul.f32 %v393, %v454
    %v506 = vmul.f32 %v394, %v459
    %v507 = vmul.f32 %v395, %v459
    %v508 = vmul.f32 %v396, %v464
    %v509 = vmul.f32 %v397, %v464
    %v510 = vmul.f32 %v398, %v469
    %v511 = vmul.f32 %v399, %v469
    %v512 = vmul.f32 %v400, %v474
    %v513 = vmul.f32 %v401, %v474
    %v514 = vmul.f32 %v402, %v479
    %v515 = vmul.f32 %v403, %v479
    %v516 = vmul.f32 %v404, %v484
    %v517 = vmul.f32 %v405, %v484
    %v518 = vpack.c.bf16 %v487, %v486
    %v519 = vpack.c.bf16 %v489, %v488
    %v520 = vpack.c.bf16 %v491, %v490
    %v521 = vpack.c.bf16 %v493, %v492
    %v522 = vpack.c.bf16 %v495, %v494
    %v523 = vpack.c.bf16 %v497, %v496
    %v524 = vpack.c.bf16 %v499, %v498
    %v525 = vpack.c.bf16 %v501, %v500
    %v526 = vpack.c.bf16 %v503, %v502
    %v527 = vpack.c.bf16 %v505, %v504
    %v528 = vpack.c.bf16 %v507, %v506
    %v529 = vpack.c.bf16 %v509, %v508
    %v530 = vpack.c.bf16 %v511, %v510
    %v531 = vpack.c.bf16 %v513, %v512
    %v532 = vpack.c.bf16 %v515, %v514
    %v533 = vpack.c.bf16 %v517, %v516
    %534 = vst [vmem:[#allocation10] sm:$0xff] %v518
    %535 = vst [vmem:[#allocation10 + $0x8] sm:$0xff] %v519
    %536 = vst [vmem:[#allocation10 + $0x10] sm:$0xff] %v520
    %537 = vst [vmem:[#allocation10 + $0x18] sm:$0xff] %v521
    %538 = vst [vmem:[#allocation10 + $0x20] sm:$0xff] %v522
    %539 = vst [vmem:[#allocation10 + $0x28] sm:$0xff] %v523
    %540 = vst [vmem:[#allocation10 + $0x30] sm:$0xff] %v524
    %541 = vst [vmem:[#allocation10 + $0x38] sm:$0xff] %v525
    %542 = vst [vmem:[#allocation10 + $0x40] sm:$0xff] %v526
    %543 = vst [vmem:[#allocation10 + $0x48] sm:$0xff] %v527
    %544 = vst [vmem:[#allocation10 + $0x50] sm:$0xff] %v528
    %545 = vst [vmem:[#allocation10 + $0x58] sm:$0xff] %v529
    %546 = vst [vmem:[#allocation10 + $0x60] sm:$0xff] %v530
    %547 = vst [vmem:[#allocation10 + $0x68] sm:$0xff] %v531
    %548 = vst [vmem:[#allocation10 + $0x70] sm:$0xff] %v532
    %549 = vst [vmem:[#allocation10 + $0x78] sm:$0xff] %v533
    // Predicated region
    $region26: #{tpu_custom_call.1} parent=1 // pred_check
      _
    $region27: #{tpu_custom_call.1} parent=1 // pred_check_branch
      %551 = sbr.rel (0) target = $region29
    $region28: #{tpu_custom_call.1} parent=1 // pred_region
      %553 = vsyncadd [#allocation4], 0
      %s554 = sshll.u32 [#allocation7], 4
      %s555 = int_to_ptr.vmem [resolvable:$true] %s554
      %s556 = sshll.u32 %s4, 4
      %s557 = int_to_ptr.hbm [resolvable:$true] %s556
      %562 = dma.vmem_to_hbm [thread:$0]  %s555, 2048, %s557, [#allocation4], 128, 128, 8
    $region29: #{tpu_custom_call.1} parent=1 // pred_fallthru
      _
    // Predicated region
    $region30: #{tpu_custom_call.1} parent=1 // pred_check
      _
    $region31: #{tpu_custom_call.1} parent=1 // pred_check_branch
      %564 = sbr.rel (0) target = $region33
    $region32: #{tpu_custom_call.1} parent=1 // pred_region
      %566 = vsyncadd [#allocation9], 0
      %s567 = sshll.u32 [#allocation8], 4
      %s568 = int_to_ptr.vmem [resolvable:$true] %s567
      %s569 = sshll.u32 %s5, 4
      %s570 = int_to_ptr.hbm [resolvable:$true] %s569
      %575 = dma.vmem_to_hbm [thread:$0]  %s568, 2048, %s570, [#allocation9], 128, 128, 8
    $region33: #{tpu_custom_call.1} parent=1 // pred_fallthru
      _
    // Predicated region
    $region34: #{tpu_custom_call.1} parent=1 // pred_check
      _
    $region35: #{tpu_custom_call.1} parent=1 // pred_check_branch
      %577 = sbr.rel (0) target = $region37
    $region36: #{tpu_custom_call.1} parent=1 // pred_region
      %579 = vsyncadd [#allocation9], 0
      %s580 = sshll.u32 [#allocation10], 4
      %s581 = int_to_ptr.vmem [resolvable:$true] %s580
      %s582 = sshll.u32 %s6, 4
      %s583 = int_to_ptr.hbm [resolvable:$true] %s582
      %588 = dma.vmem_to_hbm [thread:$0]  %s581, 2048, %s583, [#allocation9], 128, 128, 8
    $region37: #{tpu_custom_call.1} parent=1 // pred_fallthru
      _
    // Predicated region
    $region38: #{tpu_custom_call.1} parent=1 // pred_check
      _
    $region39: #{tpu_custom_call.1} parent=1 // pred_check_branch
      %590 = sbr.rel (0) target = $region41
    $region40: #{tpu_custom_call.1} parent=1 // pred_region
      %592 = dma.done [#allocation4], 2048
    $region41: #{tpu_custom_call.1} parent=1 // pred_fallthru
      _
    // Predicated region
    $region42: #{tpu_custom_call.1} parent=1 // pred_check
      _
    $region43: #{tpu_custom_call.1} parent=1 // pred_check_branch
      %594 = sbr.rel (0) target = $region45
    $region44: #{tpu_custom_call.1} parent=1 // pred_region
      %596 = dma.done [#allocation9], 2048
    $region45: #{tpu_custom_call.1} parent=1 // pred_fallthru
      _
    // Predicated region
    $region46: #{tpu_custom_call.1} parent=1 // pred_check
      _
    $region47: #{tpu_custom_call.1} parent=1 // pred_check_branch
      %598 = sbr.rel (0) target = $region49
    $region48: #{tpu_custom_call.1} parent=1 // pred_region
      %600 = dma.done [#allocation9], 2048
    $region49: #{tpu_custom_call.1} parent=1 // pred_fallthru
      _
    %601 = vsyncpa [#allocation3], 1
    %602 = vsyncpa [#allocation6], 1
    %603 = vsyncpa [#allocation4], 1
    %604 = vsyncpa [#allocation9], 1

</llo_original>
